<compile_context>
chip_gen: v6e
topology: v6e:2x2x1
jax: 0.10.0
libtpu: 0.0.40
codegen_flags: <defaults>
</compile_context>

<pallas_src>
import functools

import jax
import jax.numpy as jnp
from jax.experimental import pallas as pl
from jax.experimental.pallas import tpu as pltpu


# ---------------------------------------------------------------------------
# Kernels
# ---------------------------------------------------------------------------
def _mlp_body(x, w1_ref, b1_ref, w2_ref, b2_ref, w3_ref, b3_ref, o_ref,
              compute_dtype):
    """x: (TB, d_in) in compute_dtype.  3-layer MLP with f32 accumulation."""
    h1 = jnp.dot(x, w1_ref[...], preferred_element_type=jnp.float32) + b1_ref[...]
    h1 = jnp.maximum(h1, 0.0)                                   # relu (f32, VPU)

    h2 = jnp.dot(h1.astype(compute_dtype), w2_ref[...],
                 preferred_element_type=jnp.float32) + b2_ref[...]
    h2 = jnp.maximum(h2, 0.0)

    o_ref[...] = (jnp.dot(h2.astype(compute_dtype), w3_ref[...],
                          preferred_element_type=jnp.float32)
                  + b3_ref[...]).astype(o_ref.dtype)


def _mlp_kernel(x_ref, w1_ref, b1_ref, w2_ref, b2_ref, w3_ref, b3_ref, o_ref,
                *, compute_dtype):
    """Pre-gathered activations path (table too big to keep in VMEM)."""
    _mlp_body(x_ref[...], w1_ref, b1_ref, w2_ref, b2_ref, w3_ref, b3_ref,
              o_ref, compute_dtype)


def _mlp_gather_kernel(ids_ref, table_ref,
                       w1_ref, b1_ref, w2_ref, b2_ref, w3_ref, b3_ref, o_ref,
                       *, compute_dtype):
    """Fused path: embedding gather (exact one-hot matmul) + MLP."""
    ids = ids_ref[...]                                   # (TB, 1) int32
    tb = ids.shape[0]
    n_rows = table_ref.shape[0]
    row_ids = jax.lax.broadcasted_iota(jnp.int32, (tb, n_rows), 1)
    one_hot = (row_ids == ids).astype(compute_dtype)     # (TB, Np), exact 0/1
    x = jnp.dot(one_hot, table_ref[...],
                preferred_element_type=jnp.float32).astype(compute_dtype)
    _mlp_body(x, w1_ref, b1_ref, w2_ref, b2_ref, w3_ref, b3_ref,
              o_ref, compute_dtype)


# ---------------------------------------------------------------------------
# Param preparation (one-time, hoisted out of the forward path)
# ---------------------------------------------------------------------------
def _round_up(x, m):
    return (x + m - 1) // m * m


def _pad_cols(a, n):
    return a if a.shape[1] == n else jnp.pad(a, ((0, 0), (0, n - a.shape[1])))


def _pad_rows(a, n):
    return a if a.shape[0] == n else jnp.pad(a, ((0, n - a.shape[0]), (0, 0)))


def prepare_params(raw, *, mxu_dtype=jnp.float32):
    """Concat tables, pad to lane/sublane-friendly shapes, cast once."""
    table = jnp.concatenate([raw["description_embeddings"],
                             raw["title_embeddings"]], axis=1)
    num_items, d_in = table.shape
    n_rows = _round_up(num_items, 8)

    w1, b1 = raw["w1"], raw["b1"]   # (d_in, L1), (1, L1)
    w2, b2 = raw["w2"], raw["b2"]   # (L1, L2),  (1, L2)
    w3, b3 = raw["w3"], raw["b3"]   # (L2, L3),  (1, L3)
    L1, L2, L3 = w1.shape[1], w2.shape[1], w3.shape[1]
    L1p, L2p, L3p = _round_up(L1, 128), _round_up(L2, 128), _round_up(L3, 128)

    return dict(
        table=_pad_rows(table, n_rows).astype(mxu_dtype),
        w1=_pad_cols(w1, L1p).astype(mxu_dtype),
        b1=_pad_cols(b1, L1p).astype(jnp.float32),
        w2=_pad_cols(_pad_rows(w2, L1p), L2p).astype(mxu_dtype),
        b2=_pad_cols(b2, L2p).astype(jnp.float32),
        w3=_pad_cols(_pad_rows(w3, L2p), L3p).astype(mxu_dtype),
        b3=_pad_cols(b3, L3p).astype(jnp.float32),
        num_items=int(num_items),
        out_dim=int(L3),
    )


# ---------------------------------------------------------------------------
# Forward wrapper
# ---------------------------------------------------------------------------
def _pick_batch_tile(B):
    if B <= 256:
        # single tile; 16-row aligned so bf16 activations stay sublane-packed
        return _round_up(max(B, 8), 16)
    tb = 256
    for cand in (512, 1024, 2048):
        if B >= 2 * cand:          # keep n_tiles >= 2 (2-TC sharding on v7x)
            tb = cand
    return tb


def amazon_books_forward(ids, prepped, *, fuse_gather=None,
                         out_dtype=jnp.float32):
    table = prepped["table"]
    w1, b1 = prepped["w1"], prepped["b1"]
    w2, b2 = prepped["w2"], prepped["b2"]
    w3, b3 = prepped["w3"], prepped["b3"]
    out_dim = prepped["out_dim"]

    n_rows, d_in = table.shape
    L1p, L2p, L3p = w1.shape[1], w2.shape[1], w3.shape[1]
    compute_dtype = w1.dtype

    B = ids.shape[0]
    TB = _pick_batch_tile(B)
    Bp = _round_up(B, TB)
    n_tiles = Bp // TB

    if fuse_gather is None:
        # One-hot gather is only sensible when the whole table fits comfortably
        # in VMEM and the (TB, n_rows) one-hot stays cheap.
        fuse_gather = n_rows <= 4096

    act_spec = lambda d: pl.BlockSpec((TB, d), lambda i: (i, 0))
    # Weights / table: constant block index -> DMA'd once, stay VMEM-resident.
    wt_spec = lambda a: pl.BlockSpec(a.shape, lambda i: (0, 0))

    weight_specs = [wt_spec(w1), wt_spec(b1), wt_spec(w2), wt_spec(b2),
                    wt_spec(w3), wt_spec(b3)]
    weight_args = (w1, b1, w2, b2, w3, b3)

    itemsize = jnp.dtype(compute_dtype).itemsize
    mlp_flops = 2 * Bp * (d_in * L1p + L1p * L2p + L2p * L3p)
    weight_bytes = itemsize * (d_in * L1p + L1p * L2p + L2p * L3p) \
        + 4 * (L1p + L2p + L3p)
    out_bytes = Bp * L3p * jnp.dtype(out_dtype).itemsize

    if fuse_gather:
        ids2 = ids.astype(jnp.int32).reshape(B, 1)
        if Bp != B:
            ids2 = jnp.pad(ids2, ((0, Bp - B), (0, 0)))
        kernel = functools.partial(_mlp_gather_kernel, compute_dtype=compute_dtype)
        in_specs = [pl.BlockSpec((TB, 1), lambda i: (i, 0)), wt_spec(table)] \
            + weight_specs
        in_arrays = (ids2, table) + weight_args
        flops = mlp_flops + 2 * Bp * n_rows * d_in
        bytes_accessed = (Bp * 4 + n_rows * d_in * itemsize
                          + weight_bytes + out_bytes)
    else:
        x = jnp.take(table, ids, axis=0)                 # (B, d_in), compute_dtype
        if Bp != B:
            x = jnp.pad(x, ((0, Bp - B), (0, 0)))
        kernel = functools.partial(_mlp_kernel, compute_dtype=compute_dtype)
        in_specs = [act_spec(d_in)] + weight_specs
        in_arrays = (x,) + weight_args
        flops = mlp_flops
        bytes_accessed = Bp * d_in * itemsize + weight_bytes + out_bytes

    out = pl.pallas_call(
        kernel,
        out_shape=jax.ShapeDtypeStruct((Bp, L3p), out_dtype),
        grid=(n_tiles,),
        in_specs=in_specs,
        out_specs=act_spec(L3p),
        compiler_params=pltpu.CompilerParams(
            dimension_semantics=("parallel",)),
        cost_estimate=pl.CostEstimate(
            flops=flops, transcendentals=0, bytes_accessed=bytes_accessed),
    )(*in_arrays)

    return out[:B, :out_dim]


# ---------------------------------------------------------------------------
# Params / reference
# ---------------------------------------------------------------------------
def init_params(key, num_items, d_description, d_title,
                linear1_size, linear2_size, linear3_size):
    """Deterministic synthetic parameter init (shapes follow the torch module)."""
    # The torch module's forward is only shape-valid under this constraint
    # (linear3 is declared Linear(linear3_size, linear3_size)).
    assert linear2_size == linear3_size, (
        "AmazonBooksModelv1.forward requires linear2_size == linear3_size")

    keys = jax.random.split(key, 8)
    d_in = d_description + d_title

    def linear_init(kw, kb, fan_in, fan_out):
        # torch.nn.Linear default init: U(-1/sqrt(fan_in), 1/sqrt(fan_in))
        bound = 1.0 / jnp.sqrt(jnp.float32(fan_in))
        w = jax.random.uniform(kw, (fan_in, fan_out), jnp.float32, -bound, bound)
        b = jax.random.uniform(kb, (1, fan_out), jnp.float32, -bound, bound)
        return w, b

    desc_table = jax.random.normal(keys[0], (num_items, d_description), jnp.float32)
    title_table = jax.random.normal(keys[1], (num_items, d_title), jnp.float32)
    w1, b1 = linear_init(keys[2], keys[3], d_in, linear1_size)
    w2, b2 = linear_init(keys[4], keys[5], linear1_size, linear2_size)
    # Faithful to the torch module: Linear(linear3_size, linear3_size).
    w3, b3 = linear_init(keys[6], keys[7], linear3_size, linear3_size)

    return dict(
        description_embeddings=desc_table,
        title_embeddings=title_table,
        w1=w1, b1=b1, w2=w2, b2=b2, w3=w3, b3=b3,
    )


def reference_forward(ids, params):
    """Pure-JAX reference (mirrors the torch forward exactly)."""
    d = jnp.take(params["description_embeddings"], ids, axis=0)
    t = jnp.take(params["title_embeddings"], ids, axis=0)
    x = jnp.concatenate([d, t], axis=1)
    x = jnp.maximum(x @ params["w1"] + params["b1"], 0.0)
    x = jnp.maximum(x @ params["w2"] + params["b2"], 0.0)
    x = x @ params["w3"] + params["b3"]
    return x


if __name__ == "__main__":
    key = jax.random.PRNGKey(0)

    # Small shapes consistent with the module's forward.
    num_items = 50
    d_description = 16
    d_title = 16
    linear1_size = 64
    linear2_size = 128
    linear3_size = 128   # must equal linear2_size for forward() to be shape-valid
    batch = 8

    pkey, ikey = jax.random.split(key)
    raw_params = init_params(pkey, num_items, d_description, d_title,
                             linear1_size, linear2_size, linear3_size)
    ids = jax.random.randint(ikey, (batch,), 0, num_items, dtype=jnp.int32)

    # One-time weight prep (f32 compute for the demo; pass mxu_dtype=jnp.bfloat16
    # for halved HBM traffic + faster MXU at reduced precision).
    prepped = prepare_params(raw_params, mxu_dtype=jnp.float32)

    ref = reference_forward(ids, raw_params)

    # Fused in-kernel gather path (small table -> table resident in VMEM).
    out_fused = jax.block_until_ready(
        amazon_books_forward(ids, prepped, fuse_gather=True))
    assert out_fused.shape == (batch, linear3_size)
    assert jnp.allclose(out_fused, ref, atol=1e-4, rtol=1e-4)

    # Wrapper-gather fallback path (used for large tables) — same MLP kernel.
    out_plain = jax.block_until_ready(
        amazon_books_forward(ids, prepped, fuse_gather=False))
    assert out_plain.shape == (batch, linear3_size)
    assert jnp.allclose(out_plain, ref, atol=1e-4, rtol=1e-4)

    print("KERNEL_OK")
</pallas_src>

<mosaic_0001>
module attributes {stable_mosaic.version = 11 : i64} {
  func.func @_mlp_gather_kernel(%arg0: i32, %arg1: memref<16x1xi32, #tpu.memory_space<vmem>>, %arg2: memref<56x32xf32, #tpu.memory_space<vmem>>, %arg3: memref<32x128xf32, #tpu.memory_space<vmem>>, %arg4: memref<1x128xf32, #tpu.memory_space<vmem>>, %arg5: memref<128x128xf32, #tpu.memory_space<vmem>>, %arg6: memref<1x128xf32, #tpu.memory_space<vmem>>, %arg7: memref<128x128xf32, #tpu.memory_space<vmem>>, %arg8: memref<1x128xf32, #tpu.memory_space<vmem>>, %arg9: memref<16x128xf32, #tpu.memory_space<vmem>>) attributes {dimension_semantics = [#tpu.dimension_semantics<parallel>], iteration_bounds = array<i64: 1>, scalar_prefetch = 0 : i64, scratch_operands = 0 : i64, tpu.core_type = #tpu.core_type<tc>, window_params = [{transform_indices = @transform_0, window_bounds = array<i64: 16, 1>}, {pipeline_mode = #tpu.pipeline_mode<synchronous>, transform_indices = @transform_1, window_bounds = array<i64: 56, 32>}, {pipeline_mode = #tpu.pipeline_mode<synchronous>, transform_indices = @transform_2, window_bounds = array<i64: 32, 128>}, {pipeline_mode = #tpu.pipeline_mode<synchronous>, transform_indices = @transform_3, window_bounds = array<i64: 1, 128>}, {pipeline_mode = #tpu.pipeline_mode<synchronous>, transform_indices = @transform_4, window_bounds = array<i64: 128, 128>}, {pipeline_mode = #tpu.pipeline_mode<synchronous>, transform_indices = @transform_5, window_bounds = array<i64: 1, 128>}, {pipeline_mode = #tpu.pipeline_mode<synchronous>, transform_indices = @transform_6, window_bounds = array<i64: 128, 128>}, {pipeline_mode = #tpu.pipeline_mode<synchronous>, transform_indices = @transform_7, window_bounds = array<i64: 1, 128>}, {transform_indices = @transform_8, window_bounds = array<i64: 16, 128>}]} {
    %c0 = arith.constant 0 : index
    %c0_0 = arith.constant 0 : index
    %0 = vector.load %arg1[%c0, %c0_0] : memref<16x1xi32, #tpu.memory_space<vmem>>, vector<16x1xi32>
    %1 = tpu.iota {dimensions = array<i32: 1>} : vector<16x56xi32>
    %2 = vector.broadcast %0 : vector<16x1xi32> to vector<16x56xi32>
    %3 = arith.cmpi eq, %1, %2 : vector<16x56xi32>
    %4 = arith.extui %3 : vector<16x56xi1> to vector<16x56xi32>
    %5 = arith.sitofp %4 : vector<16x56xi32> to vector<16x56xf32>
    %c0_1 = arith.constant 0 : index
    %c0_2 = arith.constant 0 : index
    %6 = vector.load %arg2[%c0_1, %c0_2] : memref<56x32xf32, #tpu.memory_space<vmem>>, vector<56x32xf32>
    %cst = arith.constant dense<0.000000e+00> : vector<16x32xf32>
    %7 = tpu.matmul %5, %6, %cst {dimension_numbers = #tpu.dot_dimension_numbers<[1], [0], [0], [1], [0, 0, 1, 1], [], []>} : vector<16x56xf32>, vector<56x32xf32>, vector<16x32xf32> -> vector<16x32xf32>
    %c0_3 = arith.constant 0 : index
    %c0_4 = arith.constant 0 : index
    %8 = vector.load %arg3[%c0_3, %c0_4] : memref<32x128xf32, #tpu.memory_space<vmem>>, vector<32x128xf32>
    %cst_5 = arith.constant dense<0.000000e+00> : vector<16x128xf32>
    %9 = tpu.matmul %7, %8, %cst_5 {dimension_numbers = #tpu.dot_dimension_numbers<[1], [0], [0], [1], [0, 0, 1, 1], [], []>} : vector<16x32xf32>, vector<32x128xf32>, vector<16x128xf32> -> vector<16x128xf32>
    %c0_6 = arith.constant 0 : index
    %c0_7 = arith.constant 0 : index
    %10 = vector.load %arg4[%c0_6, %c0_7] : memref<1x128xf32, #tpu.memory_space<vmem>>, vector<1x128xf32>
    %11 = vector.broadcast %10 : vector<1x128xf32> to vector<16x128xf32>
    %12 = arith.addf %9, %11 : vector<16x128xf32>
    %cst_8 = arith.constant 0.000000e+00 : f32
    %13 = vector.broadcast %cst_8 : f32 to vector<16x128xf32>
    %14 = arith.maximumf %12, %13 : vector<16x128xf32>
    %c0_9 = arith.constant 0 : index
    %c0_10 = arith.constant 0 : index
    %15 = vector.load %arg5[%c0_9, %c0_10] : memref<128x128xf32, #tpu.memory_space<vmem>>, vector<128x128xf32>
    %cst_11 = arith.constant dense<0.000000e+00> : vector<16x128xf32>
    %16 = tpu.matmul %14, %15, %cst_11 {dimension_numbers = #tpu.dot_dimension_numbers<[1], [0], [0], [1], [0, 0, 1, 1], [], []>} : vector<16x128xf32>, vector<128x128xf32>, vector<16x128xf32> -> vector<16x128xf32>
    %c0_12 = arith.constant 0 : index
    %c0_13 = arith.constant 0 : index
    %17 = vector.load %arg6[%c0_12, %c0_13] : memref<1x128xf32, #tpu.memory_space<vmem>>, vector<1x128xf32>
    %18 = vector.broadcast %17 : vector<1x128xf32> to vector<16x128xf32>
    %19 = arith.addf %16, %18 : vector<16x128xf32>
    %cst_14 = arith.constant 0.000000e+00 : f32
    %20 = vector.broadcast %cst_14 : f32 to vector<16x128xf32>
    %21 = arith.maximumf %19, %20 : vector<16x128xf32>
    %c0_15 = arith.constant 0 : index
    %c0_16 = arith.constant 0 : index
    %22 = vector.load %arg7[%c0_15, %c0_16] : memref<128x128xf32, #tpu.memory_space<vmem>>, vector<128x128xf32>
    %cst_17 = arith.constant dense<0.000000e+00> : vector<16x128xf32>
    %23 = tpu.matmul %21, %22, %cst_17 {dimension_numbers = #tpu.dot_dimension_numbers<[1], [0], [0], [1], [0, 0, 1, 1], [], []>} : vector<16x128xf32>, vector<128x128xf32>, vector<16x128xf32> -> vector<16x128xf32>
    %c0_18 = arith.constant 0 : index
    %c0_19 = arith.constant 0 : index
    %24 = vector.load %arg8[%c0_18, %c0_19] : memref<1x128xf32, #tpu.memory_space<vmem>>, vector<1x128xf32>
    %25 = vector.broadcast %24 : vector<1x128xf32> to vector<16x128xf32>
    %26 = arith.addf %23, %25 : vector<16x128xf32>
    %c0_20 = arith.constant 0 : index
    %c0_21 = arith.constant 0 : index
    %27 = vector.load %arg9[%c0_20, %c0_21] : memref<16x128xf32, #tpu.memory_space<vmem>>, vector<16x128xf32>
    tpu.vector_store %arg9[%c0_20, %c0_21], %26 {strides = array<i32>} : memref<16x128xf32, #tpu.memory_space<vmem>>, vector<16x128xf32>,
    return
  }
  func.func @transform_0(%arg0: i32) -> (i32, i32) {
    %c0_i32 = arith.constant 0 : i32
    %c0_i32_0 = arith.constant 0 : i32
    return %arg0, %c0_i32 : i32, i32
  }
  func.func @transform_1(%arg0: i32) -> (i32, i32) {
    %c0_i32 = arith.constant 0 : i32
    %c0_i32_0 = arith.constant 0 : i32
    %c0_i32_1 = arith.constant 0 : i32
    return %c0_i32, %c0_i32_0 : i32, i32
  }
  func.func @transform_2(%arg0: i32) -> (i32, i32) {
    %c0_i32 = arith.constant 0 : i32
    %c0_i32_0 = arith.constant 0 : i32
    %c0_i32_1 = arith.constant 0 : i32
    return %c0_i32, %c0_i32_0 : i32, i32
  }
  func.func @transform_3(%arg0: i32) -> (i32, i32) {
    %c0_i32 = arith.constant 0 : i32
    %c0_i32_0 = arith.constant 0 : i32
    %c0_i32_1 = arith.constant 0 : i32
    return %c0_i32, %c0_i32_0 : i32, i32
  }
  func.func @transform_4(%arg0: i32) -> (i32, i32) {
    %c0_i32 = arith.constant 0 : i32
    %c0_i32_0 = arith.constant 0 : i32
    %c0_i32_1 = arith.constant 0 : i32
    return %c0_i32, %c0_i32_0 : i32, i32
  }
  func.func @transform_5(%arg0: i32) -> (i32, i32) {
    %c0_i32 = arith.constant 0 : i32
    %c0_i32_0 = arith.constant 0 : i32
    %c0_i32_1 = arith.constant 0 : i32
    return %c0_i32, %c0_i32_0 : i32, i32
  }
  func.func @transform_6(%arg0: i32) -> (i32, i32) {
    %c0_i32 = arith.constant 0 : i32
    %c0_i32_0 = arith.constant 0 : i32
    %c0_i32_1 = arith.constant 0 : i32
    return %c0_i32, %c0_i32_0 : i32, i32
  }
  func.func @transform_7(%arg0: i32) -> (i32, i32) {
    %c0_i32 = arith.constant 0 : i32
    %c0_i32_0 = arith.constant 0 : i32
    %c0_i32_1 = arith.constant 0 : i32
    return %c0_i32, %c0_i32_0 : i32, i32
  }
  func.func @transform_8(%arg0: i32) -> (i32, i32) {
    %c0_i32 = arith.constant 0 : i32
    %c0_i32_0 = arith.constant 0 : i32
    return %arg0, %c0_i32 : i32, i32
  }
}

</mosaic_0001>

<llo_original>
// kernel: tpu_custom_call.1
$region0: #{tpu_custom_call.1}
  #allocation0 [shape = 'u32[]', space=smem, size = 0x4, offset = 0x4, fixed_abs, tag = 'smem constant byte address 0x4 - core index']
  #allocation1 [shape = 'u32[144,128]{1,0:T(1,128)}', space=vmem, size = 0x12000, scoped, tag = 'internal scratch']
  %s0 = inlined_call_operand.vmem [shape: s32[16,1], index: 0, kind: input, shape index: {}]
  %s1 = inlined_call_operand.vmem [shape: f32[56,32], index: 1, kind: input, shape index: {}]
  %s2 = inlined_call_operand.vmem [shape: f32[32,128], index: 2, kind: input, shape index: {}]
  %s3 = inlined_call_operand.vmem [shape: f32[1,128], index: 3, kind: input, shape index: {}]
  %s4 = inlined_call_operand.hbm [shape: f32[128,128], index: 4, kind: input, shape index: {}]
  %s5 = inlined_call_operand.vmem [shape: f32[1,128], index: 5, kind: input, shape index: {}]
  %s6 = inlined_call_operand.hbm [shape: f32[128,128], index: 6, kind: input, shape index: {}]
  %s7 = inlined_call_operand.vmem [shape: f32[1,128], index: 7, kind: input, shape index: {}]
  %s8 = inlined_call_operand.hbm [shape: f32[16,128], index: 8, kind: output, shape index: {}]
  %s9 = sld [smem:[#allocation0]]
  $region50: #{tpu_custom_call.1} parent=0
    _
  %s11 = ssub.s32 1, %s9
  %s12 = scalar_select 0, %s11, %s9
  $region1: #{tpu_custom_call.1} parent=0
    #allocation2 [shape = 'u8[65536]{0}', space=vmem, size = 0x10000, scoped, tag = 'input window, operand 4, single buffered']
    #allocation3 [shape = 's32[1]{0}', space=sflag, size = 0x4, scoped, tag = 'scoped memory for tpu_custom_call.1']
    #allocation4 [shape = 's32[1]{0}', space=sflag, size = 0x4, scoped, tag = 'scoped memory for tpu_custom_call.1']
    #allocation5 [shape = 'u8[65536]{0}', space=vmem, size = 0x10000, scoped, tag = 'input window, operand 6, single buffered']
    #allocation6 [shape = 's32[1]{0}', space=sflag, size = 0x4, scoped, tag = 'scoped memory for tpu_custom_call.1']
    #allocation7 [shape = 'u8[8192]{0}', space=vmem, size = 0x2000, scoped, tag = 'output window, operand 0, single buffered']
    %13 = vsyncpa [#allocation3], 0
    %14 = vsyncpa [#allocation6], 0
    %15 = vsyncpa [#allocation4], 0
    // Predicated region
    $region2: #{tpu_custom_call.1} parent=1 // pred_check
      _
    $region3: #{tpu_custom_call.1} parent=1 // pred_check_branch
      %17 = sbr.rel (0) target = $region5
    $region4: #{tpu_custom_call.1} parent=1 // pred_region
      _
    $region5: #{tpu_custom_call.1} parent=1 // pred_fallthru
      _
    // Predicated region
    $region6: #{tpu_custom_call.1} parent=1 // pred_check
      _
    $region7: #{tpu_custom_call.1} parent=1 // pred_check_branch
      %19 = sbr.rel (0) target = $region9
    $region8: #{tpu_custom_call.1} parent=1 // pred_region
      _
    $region9: #{tpu_custom_call.1} parent=1 // pred_fallthru
      _
    // Predicated region
    $region10: #{tpu_custom_call.1} parent=1 // pred_check
      _
    $region11: #{tpu_custom_call.1} parent=1 // pred_check_branch
      %21 = sbr.rel (0) target = $region13
    $region12: #{tpu_custom_call.1} parent=1 // pred_region
      _
    $region13: #{tpu_custom_call.1} parent=1 // pred_fallthru
      _
    // Predicated region
    $region14: #{tpu_custom_call.1} parent=1 // pred_check
      _
    $region15: #{tpu_custom_call.1} parent=1 // pred_check_branch
      %23 = sbr.rel (0) target = $region17
    $region16: #{tpu_custom_call.1} parent=1 // pred_region
      _
    $region17: #{tpu_custom_call.1} parent=1 // pred_fallthru
      _
    // Predicated region
    $region18: #{tpu_custom_call.1} parent=1 // pred_check
      _
    $region19: #{tpu_custom_call.1} parent=1 // pred_check_branch
      %25 = sbr.rel (0) target = $region21
    $region20: #{tpu_custom_call.1} parent=1 // pred_region
      %s27 = ssub.s32 2048, 2048
      %28 = vsyncadd [#allocation3], %s27
      %s29 = sshll.u32 [#allocation2], 4
      %s30 = int_to_ptr.vmem [resolvable:$true] %s29
      %35 = dma.hbm_to_vmem [thread:$0]  %s4, 2048, %s30, [#allocation3], 128, 128, 8
    $region21: #{tpu_custom_call.1} parent=1 // pred_fallthru
      _
    // Predicated region
    $region22: #{tpu_custom_call.1} parent=1 // pred_check
      _
    $region23: #{tpu_custom_call.1} parent=1 // pred_check_branch
      %37 = sbr.rel (0) target = $region25
    $region24: #{tpu_custom_call.1} parent=1 // pred_region
      _
    $region25: #{tpu_custom_call.1} parent=1 // pred_fallthru
      _
    // Predicated region
    $region26: #{tpu_custom_call.1} parent=1 // pred_check
      _
    $region27: #{tpu_custom_call.1} parent=1 // pred_check_branch
      %39 = sbr.rel (0) target = $region29
    $region28: #{tpu_custom_call.1} parent=1 // pred_region
      %s41 = ssub.s32 2048, 2048
      %42 = vsyncadd [#allocation6], %s41
      %s43 = sshll.u32 [#allocation5], 4
      %s44 = int_to_ptr.vmem [resolvable:$true] %s43
      %49 = dma.hbm_to_vmem [thread:$0]  %s6, 2048, %s44, [#allocation6], 128, 128, 8
    $region29: #{tpu_custom_call.1} parent=1 // pred_fallthru
      _
    // Predicated region
    $region30: #{tpu_custom_call.1} parent=1 // pred_check
      _
    $region31: #{tpu_custom_call.1} parent=1 // pred_check_branch
      %51 = sbr.rel (0) target = $region33
    $region32: #{tpu_custom_call.1} parent=1 // pred_region
      _
    $region33: #{tpu_custom_call.1} parent=1 // pred_fallthru
      _
    // Predicated region
    $region34: #{tpu_custom_call.1} parent=1 // pred_check
      _
    $region35: #{tpu_custom_call.1} parent=1 // pred_check_branch
      %53 = sbr.rel (0) target = $region37
    $region36: #{tpu_custom_call.1} parent=1 // pred_region
      %54 = dma.done [#allocation3], 2048
    $region37: #{tpu_custom_call.1} parent=1 // pred_fallthru
      _
    // Predicated region
    $region38: #{tpu_custom_call.1} parent=1 // pred_check
      _
    $region39: #{tpu_custom_call.1} parent=1 // pred_check_branch
      %56 = sbr.rel (0) target = $region41
    $region40: #{tpu_custom_call.1} parent=1 // pred_region
      %57 = dma.done [#allocation6], 2048
    $region41: #{tpu_custom_call.1} parent=1 // pred_fallthru
      _
    %v58 = vld [vmem:[%s0] sm:$0xff]
    %v59 = vld [vmem:[%s0 + $0x8] sm:$0xff]
    %v60 = vlaneseq
    %v61 = vand.u32 %v60, 127
    %62 = vset.pattern.permute.xlu0 0
    %63 = vperm.xlu0 %62, %v58
    %v64 = vpop.permute.xlu0 %63
    %65 = vset.pattern.permute.xlu0 0
    %66 = vperm.xlu0 %65, %v59
    %v67 = vpop.permute.xlu0 %66
    %vm68 = vcmp.eq.s32.totalorder %v61, %v64
    %vm69 = vcmp.eq.s32.totalorder %v61, %v67
    %v70 = vsel %vm68, 1, 0
    %v71 = vsel %vm69, 1, 0
    %v72 = vcvt.s32.f32 %v70
    %v73 = vcvt.s32.f32 %v71
    %v74 = vld [vmem:[%s1] sm:$0xff]
    %v75 = vld [vmem:[%s1 + $0x8] sm:$0xff]
    %v76 = vld [vmem:[%s1 + $0x10] sm:$0xff]
    %v77 = vld [vmem:[%s1 + $0x18] sm:$0xff]
    %v78 = vld [vmem:[%s1 + $0x20] sm:$0xff]
    %v79 = vld [vmem:[%s1 + $0x28] sm:$0xff]
    %v80 = vld [vmem:[%s1 + $0x30] sm:$0xff]
    %vm81 = vcmask 457728
    %v83 = vsel %vm81, %v72, 0
    %v86 = vsel %vm81, %v73, 0
    %88 = vmatprep.subr.mxu0 0.0
    %89 = vmatpush1.msra.mxu0 0.0
    %90 = vmatprep.subr.mxu0 0.0
    %91 = vmatpush1.msra.mxu0 0.0
    %92 = vmatprep.subr.mxu0 0.0
    %93 = vmatpush1.msra.mxu0 0.0
    %94 = vmatprep.subr.mxu0 0.0
    %95 = vmatpush1.msra.mxu0 0.0
    %96 = vmatprep.subr.mxu0 0.0
    %97 = vmatpush1.msra.mxu0 0.0
    %98 = vmatprep.subr.mxu0 0.0
    %99 = vmatpush1.msra.mxu0 0.0
    %100 = vmatprep.subr.mxu0 0.0
    %101 = vmatpush1.msra.mxu0 0.0
    %102 = vmatprep.subr.mxu0 0.0
    %103 = vmatpush1.msra.mxu0 0.0
    %104 = vmatprep.subr.mxu0 0.0
    %105 = vmatpush1.msra.mxu0 0.0
    %106 = vmatprep.subr.mxu0 0.0
    %107 = vmatpush1.msra.mxu0 %v80
    %108 = vmatprep.subr.mxu0 0.0
    %109 = vmatpush1.msra.mxu0 %v79
    %110 = vmatprep.subr.mxu0 0.0
    %111 = vmatpush1.msra.mxu0 %v78
    %112 = vmatprep.subr.mxu0 0.0
    %113 = vmatpush1.msra.mxu0 %v77
    %114 = vmatprep.subr.mxu0 0.0
    %115 = vmatpush1.msra.mxu0 %v76
    %116 = vmatprep.subr.mxu0 0.0
    %117 = vmatpush1.msra.mxu0 %v75
    %118 = vmatprep.subr.mxu0 0.0
    %119 = vmatpush1.msra.mxu0 %v74
    %120 = vmatprep.subr.mxu0 0.0
    %121 = vmatpush2.msra.mxu0 0.0
    %122 = vmatprep.subr.mxu0 0.0
    %123 = vmatpush2.msra.mxu0 0.0
    %124 = vmatprep.subr.mxu0 0.0
    %125 = vmatpush2.msra.mxu0 0.0
    %126 = vmatprep.subr.mxu0 0.0
    %127 = vmatpush2.msra.mxu0 0.0
    %128 = vmatprep.subr.mxu0 0.0
    %129 = vmatpush2.msra.mxu0 0.0
    %130 = vmatprep.subr.mxu0 0.0
    %131 = vmatpush2.msra.mxu0 0.0
    %132 = vmatprep.subr.mxu0 0.0
    %133 = vmatpush2.msra.mxu0 0.0
    %134 = vmatprep.subr.mxu0 0.0
    %135 = vmatpush2.msra.mxu0 0.0
    %136 = vmatprep.subr.mxu0 0.0
    %137 = vmatpush2.msra.mxu0 0.0
    %138 = vmatprep.subr.mxu0 0.0
    %139 = vmatpush2.msra.mxu0 0.0
    %140 = vmatprep.subr.mxu0 0.0
    %141 = vmatpush2.msra.mxu0 0.0
    %142 = vmatprep.subr.mxu0 0.0
    %143 = vmatpush2.msra.mxu0 0.0
    %144 = vmatprep.subr.mxu0 0.0
    %145 = vmatpush2.msra.mxu0 0.0
    %146 = vmatprep.subr.mxu0 0.0
    %147 = vmatpush2.msra.mxu0 0.0
    %148 = vmatprep.subr.mxu0 0.0
    %149 = vmatpush2.msra.mxu0 0.0
    %150 = vmatprep.subr.mxu0 0.0
    %151 = vmatpush2.msra.mxu0 0.0
    %152 = vmatprep.mubr.f32.mxu0 0.0
    %153 = vmatmul.mubr.f32.gmra.mxu0 %v83
    %v154 = vpop.f32.mrf.mxu0
    %v155 = vadd.f32 0.0, %v154
    %v156 = vpop.f32.mrf.mxu0
    %157 = vmatprep.mubr.f32.mxu0 0.0
    %158 = vmatmul.mubr.f32.gmra.mxu0 %v86
    %v159 = vpop.f32.mrf.mxu0
    %v160 = vadd.f32 0.0, %v159
    %v161 = vpop.f32.mrf.mxu0
    %162 = vdwg.mxu0
    %v163 = vld [vmem:[%s2] sm:$0xff]
    %v164 = vld [vmem:[%s2 + $0x8] sm:$0xff]
    %v165 = vld [vmem:[%s2 + $0x10] sm:$0xff]
    %v166 = vld [vmem:[%s2 + $0x18] sm:$0xff]
    %v167 = vld [vmem:[%s3] sm:$0x1]
    %v169 = vlaneseq
    %v170 = vshrl.u32 %v169, 7
    %v171 = vsub.s32 0, %v170
    %v172 = vrot.slane %v167, %v171
    %vm174 = vcmask 261120
    %v176 = vsel %vm174, %v155, 0
    %v179 = vsel %vm174, %v160, 0
    %181 = vmatprep.subr.mxu0 0.0
    %182 = vmatpush1.msra.mxu0 0.0
    %183 = vmatprep.subr.mxu0 0.0
    %184 = vmatpush1.msra.mxu0 0.0
    %185 = vmatprep.subr.mxu0 0.0
    %186 = vmatpush1.msra.mxu0 0.0
    %187 = vmatprep.subr.mxu0 0.0
    %188 = vmatpush1.msra.mxu0 0.0
    %189 = vmatprep.subr.mxu0 0.0
    %190 = vmatpush1.msra.mxu0 0.0
    %191 = vmatprep.subr.mxu0 0.0
    %192 = vmatpush1.msra.mxu0 0.0
    %193 = vmatprep.subr.mxu0 0.0
    %194 = vmatpush1.msra.mxu0 0.0
    %195 = vmatprep.subr.mxu0 0.0
    %196 = vmatpush1.msra.mxu0 0.0
    %197 = vmatprep.subr.mxu0 0.0
    %198 = vmatpush1.msra.mxu0 0.0
    %199 = vmatprep.subr.mxu0 0.0
    %200 = vmatpush1.msra.mxu0 0.0
    %201 = vmatprep.subr.mxu0 0.0
    %202 = vmatpush1.msra.mxu0 0.0
    %203 = vmatprep.subr.mxu0 0.0
    %204 = vmatpush1.msra.mxu0 0.0
    %205 = vmatprep.subr.mxu0 0.0
    %206 = vmatpush1.msra.mxu0 %v166
    %207 = vmatprep.subr.mxu0 0.0
    %208 = vmatpush1.msra.mxu0 %v165
    %209 = vmatprep.subr.mxu0 0.0
    %210 = vmatpush1.msra.mxu0 %v164
    %211 = vmatprep.subr.mxu0 0.0
    %212 = vmatpush1.msra.mxu0 %v163
    %213 = vmatprep.subr.mxu0 0.0
    %214 = vmatpush2.msra.mxu0 0.0
    %215 = vmatprep.subr.mxu0 0.0
    %216 = vmatpush2.msra.mxu0 0.0
    %217 = vmatprep.subr.mxu0 0.0
    %218 = vmatpush2.msra.mxu0 0.0
    %219 = vmatprep.subr.mxu0 0.0
    %220 = vmatpush2.msra.mxu0 0.0
    %221 = vmatprep.subr.mxu0 0.0
    %222 = vmatpush2.msra.mxu0 0.0
    %223 = vmatprep.subr.mxu0 0.0
    %224 = vmatpush2.msra.mxu0 0.0
    %225 = vmatprep.subr.mxu0 0.0
    %226 = vmatpush2.msra.mxu0 0.0
    %227 = vmatprep.subr.mxu0 0.0
    %228 = vmatpush2.msra.mxu0 0.0
    %229 = vmatprep.subr.mxu0 0.0
    %230 = vmatpush2.msra.mxu0 0.0
    %231 = vmatprep.subr.mxu0 0.0
    %232 = vmatpush2.msra.mxu0 0.0
    %233 = vmatprep.subr.mxu0 0.0
    %234 = vmatpush2.msra.mxu0 0.0
    %235 = vmatprep.subr.mxu0 0.0
    %236 = vmatpush2.msra.mxu0 0.0
    %237 = vmatprep.subr.mxu0 0.0
    %238 = vmatpush2.msra.mxu0 0.0
    %239 = vmatprep.subr.mxu0 0.0
    %240 = vmatpush2.msra.mxu0 0.0
    %241 = vmatprep.subr.mxu0 0.0
    %242 = vmatpush2.msra.mxu0 0.0
    %243 = vmatprep.subr.mxu0 0.0
    %244 = vmatpush2.msra.mxu0 0.0
    %245 = vmatprep.mubr.f32.mxu0 0.0
    %246 = vmatmul.mubr.f32.gmra.mxu0 %v176
    %v247 = vpop.f32.mrf.mxu0
    %v248 = vadd.f32 %v172, %v247
    %v249 = vpop.f32.mrf.mxu0
    %250 = vmatprep.mubr.f32.mxu0 0.0
    %251 = vmatmul.mubr.f32.gmra.mxu0 %v179
    %v252 = vpop.f32.mrf.mxu0
    %v253 = vadd.f32 %v172, %v252
    %v254 = vpop.f32.mrf.mxu0
    %255 = vdwg.mxu0
    %v256 = vmax.f32 %v248, 0.0
    %v257 = vmax.f32 %v253, 0.0
    %v258 = vld [vmem:[#allocation2] sm:$0xff]
    %v259 = vld [vmem:[#allocation2 + $0x8] sm:$0xff]
    %v260 = vld [vmem:[#allocation2 + $0x10] sm:$0xff]
    %v261 = vld [vmem:[#allocation2 + $0x18] sm:$0xff]
    %v262 = vld [vmem:[#allocation2 + $0x20] sm:$0xff]
    %v263 = vld [vmem:[#allocation2 + $0x28] sm:$0xff]
    %v264 = vld [vmem:[#allocation2 + $0x30] sm:$0xff]
    %v265 = vld [vmem:[#allocation2 + $0x38] sm:$0xff]
    %v266 = vld [vmem:[#allocation2 + $0x40] sm:$0xff]
    %v267 = vld [vmem:[#allocation2 + $0x48] sm:$0xff]
    %v268 = vld [vmem:[#allocation2 + $0x50] sm:$0xff]
    %v269 = vld [vmem:[#allocation2 + $0x58] sm:$0xff]
    %v270 = vld [vmem:[#allocation2 + $0x60] sm:$0xff]
    %v271 = vld [vmem:[#allocation2 + $0x68] sm:$0xff]
    %v272 = vld [vmem:[#allocation2 + $0x70] sm:$0xff]
    %v273 = vld [vmem:[#allocation2 + $0x78] sm:$0xff]
    %v274 = vld [vmem:[%s5] sm:$0x1]
    %v276 = vlaneseq
    %v277 = vshrl.u32 %v276, 7
    %v278 = vsub.s32 0, %v277
    %v279 = vrot.slane %v274, %v278
    %281 = vmatprep.subr.mxu0 0.0
    %282 = vmatpush1.msra.mxu0 %v273
    %283 = vmatprep.subr.mxu0 0.0
    %284 = vmatpush1.msra.mxu0 %v272
    %285 = vmatprep.subr.mxu0 0.0
    %286 = vmatpush1.msra.mxu0 %v271
    %287 = vmatprep.subr.mxu0 0.0
    %288 = vmatpush1.msra.mxu0 %v270
    %289 = vmatprep.subr.mxu0 0.0
    %290 = vmatpush1.msra.mxu0 %v269
    %291 = vmatprep.subr.mxu0 0.0
    %292 = vmatpush1.msra.mxu0 %v268
    %293 = vmatprep.subr.mxu0 0.0
    %294 = vmatpush1.msra.mxu0 %v267
    %295 = vmatprep.subr.mxu0 0.0
    %296 = vmatpush1.msra.mxu0 %v266
    %297 = vmatprep.subr.mxu0 0.0
    %298 = vmatpush1.msra.mxu0 %v265
    %299 = vmatprep.subr.mxu0 0.0
    %300 = vmatpush1.msra.mxu0 %v264
    %301 = vmatprep.subr.mxu0 0.0
    %302 = vmatpush1.msra.mxu0 %v263
    %303 = vmatprep.subr.mxu0 0.0
    %304 = vmatpush1.msra.mxu0 %v262
    %305 = vmatprep.subr.mxu0 0.0
    %306 = vmatpush1.msra.mxu0 %v261
    %307 = vmatprep.subr.mxu0 0.0
    %308 = vmatpush1.msra.mxu0 %v260
    %309 = vmatprep.subr.mxu0 0.0
    %310 = vmatpush1.msra.mxu0 %v259
    %311 = vmatprep.subr.mxu0 0.0
    %312 = vmatpush1.msra.mxu0 %v258
    %313 = vmatprep.subr.mxu0 0.0
    %314 = vmatpush2.msra.mxu0 0.0
    %315 = vmatprep.subr.mxu0 0.0
    %316 = vmatpush2.msra.mxu0 0.0
    %317 = vmatprep.subr.mxu0 0.0
    %318 = vmatpush2.msra.mxu0 0.0
    %319 = vmatprep.subr.mxu0 0.0
    %320 = vmatpush2.msra.mxu0 0.0
    %321 = vmatprep.subr.mxu0 0.0
    %322 = vmatpush2.msra.mxu0 0.0
    %323 = vmatprep.subr.mxu0 0.0
    %324 = vmatpush2.msra.mxu0 0.0
    %325 = vmatprep.subr.mxu0 0.0
    %326 = vmatpush2.msra.mxu0 0.0
    %327 = vmatprep.subr.mxu0 0.0
    %328 = vmatpush2.msra.mxu0 0.0
    %329 = vmatprep.subr.mxu0 0.0
    %330 = vmatpush2.msra.mxu0 0.0
    %331 = vmatprep.subr.mxu0 0.0
    %332 = vmatpush2.msra.mxu0 0.0
    %333 = vmatprep.subr.mxu0 0.0
    %334 = vmatpush2.msra.mxu0 0.0
    %335 = vmatprep.subr.mxu0 0.0
    %336 = vmatpush2.msra.mxu0 0.0
    %337 = vmatprep.subr.mxu0 0.0
    %338 = vmatpush2.msra.mxu0 0.0
    %339 = vmatprep.subr.mxu0 0.0
    %340 = vmatpush2.msra.mxu0 0.0
    %341 = vmatprep.subr.mxu0 0.0
    %342 = vmatpush2.msra.mxu0 0.0
    %343 = vmatprep.subr.mxu0 0.0
    %344 = vmatpush2.msra.mxu0 0.0
    %345 = vmatprep.mubr.f32.mxu0 0.0
    %346 = vmatmul.mubr.f32.gmra.mxu0 %v256
    %v347 = vpop.f32.mrf.mxu0
    %v348 = vadd.f32 %v279, %v347
    %v349 = vpop.f32.mrf.mxu0
    %350 = vmatprep.mubr.f32.mxu0 0.0
    %351 = vmatmul.mubr.f32.gmra.mxu0 %v257
    %v352 = vpop.f32.mrf.mxu0
    %v353 = vadd.f32 %v279, %v352
    %v354 = vpop.f32.mrf.mxu0
    %355 = vdwg.mxu0
    %v356 = vmax.f32 %v348, 0.0
    %v357 = vmax.f32 %v353, 0.0
    %v358 = vld [vmem:[#allocation5] sm:$0xff]
    %v359 = vld [vmem:[#allocation5 + $0x8] sm:$0xff]
    %v360 = vld [vmem:[#allocation5 + $0x10] sm:$0xff]
    %v361 = vld [vmem:[#allocation5 + $0x18] sm:$0xff]
    %v362 = vld [vmem:[#allocation5 + $0x20] sm:$0xff]
    %v363 = vld [vmem:[#allocation5 + $0x28] sm:$0xff]
    %v364 = vld [vmem:[#allocation5 + $0x30] sm:$0xff]
    %v365 = vld [vmem:[#allocation5 + $0x38] sm:$0xff]
    %v366 = vld [vmem:[#allocation5 + $0x40] sm:$0xff]
    %v367 = vld [vmem:[#allocation5 + $0x48] sm:$0xff]
    %v368 = vld [vmem:[#allocation5 + $0x50] sm:$0xff]
    %v369 = vld [vmem:[#allocation5 + $0x58] sm:$0xff]
    %v370 = vld [vmem:[#allocation5 + $0x60] sm:$0xff]
    %v371 = vld [vmem:[#allocation5 + $0x68] sm:$0xff]
    %v372 = vld [vmem:[#allocation5 + $0x70] sm:$0xff]
    %v373 = vld [vmem:[#allocation5 + $0x78] sm:$0xff]
    %v374 = vld [vmem:[%s7] sm:$0x1]
    %v376 = vlaneseq
    %v377 = vshrl.u32 %v376, 7
    %v378 = vsub.s32 0, %v377
    %v379 = vrot.slane %v374, %v378
    %381 = vmatprep.subr.mxu0 0.0
    %382 = vmatpush1.msra.mxu0 %v373
    %383 = vmatprep.subr.mxu0 0.0
    %384 = vmatpush1.msra.mxu0 %v372
    %385 = vmatprep.subr.mxu0 0.0
    %386 = vmatpush1.msra.mxu0 %v371
    %387 = vmatprep.subr.mxu0 0.0
    %388 = vmatpush1.msra.mxu0 %v370
    %389 = vmatprep.subr.mxu0 0.0
    %390 = vmatpush1.msra.mxu0 %v369
    %391 = vmatprep.subr.mxu0 0.0
    %392 = vmatpush1.msra.mxu0 %v368
    %393 = vmatprep.subr.mxu0 0.0
    %394 = vmatpush1.msra.mxu0 %v367
    %395 = vmatprep.subr.mxu0 0.0
    %396 = vmatpush1.msra.mxu0 %v366
    %397 = vmatprep.subr.mxu0 0.0
    %398 = vmatpush1.msra.mxu0 %v365
    %399 = vmatprep.subr.mxu0 0.0
    %400 = vmatpush1.msra.mxu0 %v364
    %401 = vmatprep.subr.mxu0 0.0
    %402 = vmatpush1.msra.mxu0 %v363
    %403 = vmatprep.subr.mxu0 0.0
    %404 = vmatpush1.msra.mxu0 %v362
    %405 = vmatprep.subr.mxu0 0.0
    %406 = vmatpush1.msra.mxu0 %v361
    %407 = vmatprep.subr.mxu0 0.0
    %408 = vmatpush1.msra.mxu0 %v360
    %409 = vmatprep.subr.mxu0 0.0
    %410 = vmatpush1.msra.mxu0 %v359
    %411 = vmatprep.subr.mxu0 0.0
    %412 = vmatpush1.msra.mxu0 %v358
    %413 = vmatprep.subr.mxu0 0.0
    %414 = vmatpush2.msra.mxu0 0.0
    %415 = vmatprep.subr.mxu0 0.0
    %416 = vmatpush2.msra.mxu0 0.0
    %417 = vmatprep.subr.mxu0 0.0
    %418 = vmatpush2.msra.mxu0 0.0
    %419 = vmatprep.subr.mxu0 0.0
    %420 = vmatpush2.msra.mxu0 0.0
    %421 = vmatprep.subr.mxu0 0.0
    %422 = vmatpush2.msra.mxu0 0.0
    %423 = vmatprep.subr.mxu0 0.0
    %424 = vmatpush2.msra.mxu0 0.0
    %425 = vmatprep.subr.mxu0 0.0
    %426 = vmatpush2.msra.mxu0 0.0
    %427 = vmatprep.subr.mxu0 0.0
    %428 = vmatpush2.msra.mxu0 0.0
    %429 = vmatprep.subr.mxu0 0.0
    %430 = vmatpush2.msra.mxu0 0.0
    %431 = vmatprep.subr.mxu0 0.0
    %432 = vmatpush2.msra.mxu0 0.0
    %433 = vmatprep.subr.mxu0 0.0
    %434 = vmatpush2.msra.mxu0 0.0
    %435 = vmatprep.subr.mxu0 0.0
    %436 = vmatpush2.msra.mxu0 0.0
    %437 = vmatprep.subr.mxu0 0.0
    %438 = vmatpush2.msra.mxu0 0.0
    %439 = vmatprep.subr.mxu0 0.0
    %440 = vmatpush2.msra.mxu0 0.0
    %441 = vmatprep.subr.mxu0 0.0
    %442 = vmatpush2.msra.mxu0 0.0
    %443 = vmatprep.subr.mxu0 0.0
    %444 = vmatpush2.msra.mxu0 0.0
    %445 = vmatprep.mubr.f32.mxu0 0.0
    %446 = vmatmul.mubr.f32.gmra.mxu0 %v356
    %v447 = vpop.f32.mrf.mxu0
    %v448 = vadd.f32 %v379, %v447
    %v449 = vpop.f32.mrf.mxu0
    %450 = vmatprep.mubr.f32.mxu0 0.0
    %451 = vmatmul.mubr.f32.gmra.mxu0 %v357
    %v452 = vpop.f32.mrf.mxu0
    %v453 = vadd.f32 %v379, %v452
    %v454 = vpop.f32.mrf.mxu0
    %455 = vdwg.mxu0
    %456 = vst [vmem:[#allocation7] sm:$0xff] %v448
    %457 = vst [vmem:[#allocation7 + $0x8] sm:$0xff] %v453
    // Predicated region
    $region42: #{tpu_custom_call.1} parent=1 // pred_check
      _
    $region43: #{tpu_custom_call.1} parent=1 // pred_check_branch
      %459 = sbr.rel (0) target = $region45
    $region44: #{tpu_custom_call.1} parent=1 // pred_region
      %s461 = ssub.s32 256, 256
      %462 = vsyncadd [#allocation4], %s461
      %s463 = sshll.u32 [#allocation7], 4
      %s464 = int_to_ptr.vmem [resolvable:$true] %s463
      %469 = dma.vmem_to_hbm [thread:$0]  %s464, 256, %s8, [#allocation4], 128, 128, 8
    $region45: #{tpu_custom_call.1} parent=1 // pred_fallthru
      _
    // Predicated region
    $region46: #{tpu_custom_call.1} parent=1 // pred_check
      _
    $region47: #{tpu_custom_call.1} parent=1 // pred_check_branch
      %471 = sbr.rel (0) target = $region49
    $region48: #{tpu_custom_call.1} parent=1 // pred_region
      %472 = dma.done [#allocation4], 256
    $region49: #{tpu_custom_call.1} parent=1 // pred_fallthru
      _
    %473 = vsyncpa [#allocation3], 1
    %474 = vsyncpa [#allocation6], 1
    %475 = vsyncpa [#allocation4], 1

</llo_original>
